<compile_context>
chip_gen: v7x
topology: tpu7x:2x2x1
jax: 0.10.0
libtpu: 0.0.40
codegen_flags: <defaults>
</compile_context>

<pallas_src>
import functools

import jax
import jax.numpy as jnp
from jax import lax
from jax.experimental import pallas as pl
from jax.experimental.pallas import tpu as pltpu

LANE = 128   # vreg lane width
SUB = 8      # f32 sublane tile


def _round_up(x, m):
    return -(-x // m) * m


def _cdiv(a, b):
    return -(-a // b)


def _tpu_config():
    """Generation-aware fuse/block thresholds (defaults are single-TC safe)."""
    try:
        kind = jax.devices()[0].device_kind.lower()
    except Exception:
        kind = ""
    if "7" in kind:
        # v7x: 2 TCs/chip, 3.2 TB/s HBM, 64 MiB VMEM per TC.
        return {"fuse_limit": 4 << 20, "block_bytes": 4 << 20, "vmem_cap": 48 << 20}
    # v5e / v6e: 1 TC/chip, 128 MiB VMEM -> fused (2 HBM passes) wins widely.
    return {"fuse_limit": 24 << 20, "block_bytes": 1 << 20, "vmem_cap": 100 << 20}


# ---------------------------------------------------------------------------
# Fused kernels: whole tensor resident in VMEM, single invocation (1R + 1W).
# ---------------------------------------------------------------------------
def _fused_kbit_kernel(x_ref, o_ref, *, n, inv_n):
    """out = round((tanh(x)/max|tanh(x)|) * n) / n, n = 2^(w_bit-1) - 1."""
    t = jnp.tanh(x_ref[...].astype(jnp.float32))
    scale = n / jnp.max(jnp.abs(t))            # one scalar divide per tensor
    o_ref[...] = (jnp.round(t * scale) * inv_n).astype(o_ref.dtype)


def _fused_1bit_kernel(x_ref, o_ref, *, n, inv_count):
    """Faithful w_bit==1 branch: uniform_quantize(k=0) -> n == 0."""
    x = x_ref[...].astype(jnp.float32)
    e = jnp.sum(jnp.abs(x)) * inv_count        # mean|x| (slab holds exactly x)
    y = x * (1.0 / e)
    # TODO(synk): reproduces the original round(y*0)/0 NaN result on purpose.
    q = jnp.round(y * n) / n
    o_ref[...] = ((q + 1.0) * 0.5 * e).astype(o_ref.dtype)


# ---------------------------------------------------------------------------
# Tiled pass 1: per-block (SUB, C) partial statistic, fully parallel grid.
# tanh-free (review): max|tanh(x)| == tanh(max|x|) is applied to the scalar.
# ---------------------------------------------------------------------------
def _partial_absmax_kernel(x_ref, part_ref, *, block_rows, valid_rows, mask):
    a = jnp.abs(x_ref[...].astype(jnp.float32))
    if mask:  # only the ragged last block needs this (compile-time flag)
        row = (pl.program_id(0) * block_rows
               + lax.broadcasted_iota(jnp.int32, a.shape, 0))
        a = jnp.where(row < valid_rows, a, 0.0)
    part_ref[...] = jnp.max(a.reshape(-1, SUB, a.shape[-1]), axis=0)


def _partial_abssum_kernel(x_ref, part_ref, *, block_rows, valid_rows, mask):
    a = jnp.abs(x_ref[...].astype(jnp.float32))
    if mask:
        row = (pl.program_id(0) * block_rows
               + lax.broadcasted_iota(jnp.int32, a.shape, 0))
        a = jnp.where(row < valid_rows, a, 0.0)
    part_ref[...] = jnp.sum(a.reshape(-1, SUB, a.shape[-1]), axis=0)


# ---------------------------------------------------------------------------
# Tiled pass 2: elementwise quantization; per-tensor scalars come via SMEM.
# ---------------------------------------------------------------------------
def _quant_kbit_kernel(s_ref, x_ref, o_ref, *, inv_n):
    scale = s_ref[0]                           # n / max|tanh(x)| (precomputed)
    t = jnp.tanh(x_ref[...].astype(jnp.float32))
    o_ref[...] = (jnp.round(t * scale) * inv_n).astype(o_ref.dtype)


def _quant_1bit_kernel(s_ref, x_ref, o_ref, *, n):
    inv_e, e = s_ref[0], s_ref[1]
    y = x_ref[...].astype(jnp.float32) * inv_e
    # TODO(synk): same deliberate n == 0 NaN reproduction as the fused path.
    q = jnp.round(y * n) / n
    o_ref[...] = ((q + 1.0) * 0.5 * e).astype(o_ref.dtype)


# ---------------------------------------------------------------------------
# Wrapper
# ---------------------------------------------------------------------------
def _as_slab(x):
    """Layout-preserving 2-D view: collapse leading dims, keep the last dim."""
    total = x.size
    if x.ndim >= 2:
        last = x.shape[-1]
        return x.reshape(total // last, last)
    return x.reshape(1, max(total, 1))


def weight_quantize(x, w_bit, *, fuse_limit_bytes=None, block_bytes=None):
    """Pallas implementation of weight_quantize_fn(w_bit).forward(x)."""
    assert w_bit <= 8 or w_bit == 32
    if w_bit == 32:
        return x                                           # identity path

    cfg = _tpu_config()
    fuse_limit = cfg["fuse_limit"] if fuse_limit_bytes is None else fuse_limit_bytes
    blk_bytes = cfg["block_bytes"] if block_bytes is None else block_bytes
    vmem_cap = cfg["vmem_cap"]

    orig_shape, orig_dtype = x.shape, x.dtype
    total = x.size
    itemsize = jnp.dtype(orig_dtype).itemsize
    n = float(2 ** (w_bit - 1) - 1)                        # uniform_quantize(k=w_bit-1)

    slab = _as_slab(x)
    R, C = slab.shape
    # Pathological "few rows, huge last dim": re-flatten lane-dense when exact.
    if C * SUB * 4 > (16 << 20) and total % LANE == 0:
        slab = x.reshape(total // LANE, LANE)
        R, C = slab.shape

    slab_f32_bytes = R * C * 4
    io_bytes = 2 * total * itemsize
    fused = (slab_f32_bytes <= fuse_limit
             or (R <= 2 * SUB and slab_f32_bytes <= (32 << 20)))

    if fused:
        vmem_limit = min(vmem_cap, max(32 << 20, 4 * slab_f32_bytes + (2 << 20)))
        if w_bit == 1:
            kern = functools.partial(_fused_1bit_kernel, n=n, inv_count=1.0 / total)
            trans = 0
        else:
            kern = functools.partial(_fused_kbit_kernel, n=n, inv_n=1.0 / n)
            trans = total
        qf = pl.pallas_call(
            kern,
            out_shape=jax.ShapeDtypeStruct((R, C), orig_dtype),
            compiler_params=pltpu.CompilerParams(vmem_limit_bytes=vmem_limit),
            cost_estimate=pl.CostEstimate(flops=5 * total, transcendentals=trans,
                                          bytes_accessed=io_bytes),
        )(slab)
        return qf.reshape(orig_shape)

    # ------------------------- tiled two-pass path -------------------------
    block_rows = max(SUB, (blk_bytes // (C * 4)) // SUB * SUB)
    block_rows = min(block_rows, _round_up(R, SUB))
    grid_len = _cdiv(R, block_rows)
    need_mask = (R % block_rows) != 0
    block_f32_bytes = block_rows * C * 4
    vmem_limit = min(vmem_cap, max(32 << 20, 5 * block_f32_bytes + (2 << 20)))

    tile_spec = pl.BlockSpec((block_rows, C), lambda i: (i, 0))
    part_spec = pl.BlockSpec((SUB, C), lambda i: (i, 0))
    smem_spec = pl.BlockSpec(memory_space=pltpu.MemorySpace.SMEM)
    params = pltpu.CompilerParams(dimension_semantics=("parallel",),
                                  vmem_limit_bytes=vmem_limit)

    # Pass 1: tanh-free partial reduction (VPU only, HBM-bound).
    red_kern = _partial_abssum_kernel if w_bit == 1 else _partial_absmax_kernel
    partials = pl.pallas_call(
        functools.partial(red_kern, block_rows=block_rows, valid_rows=R,
                          mask=need_mask),
        out_shape=jax.ShapeDtypeStruct((grid_len * SUB, C), jnp.float32),
        grid=(grid_len,),
        in_specs=[tile_spec],
        out_specs=part_spec,
        compiler_params=params,
        cost_estimate=pl.CostEstimate(
            flops=2 * total, transcendentals=0,
            bytes_accessed=total * itemsize + grid_len * SUB * C * 4),
    )(slab)

    # Tiny glue: combine partials into the per-tensor scalars the quant pass needs.
    if w_bit == 1:
        e = (jnp.sum(partials) * jnp.float32(1.0 / total)).astype(jnp.float32)
        scalars = jnp.stack([1.0 / e, e]).astype(jnp.float32)
        quant_kern = functools.partial(_quant_1bit_kernel, n=n)
        trans = 0
    else:
        stat = jnp.tanh(jnp.max(partials))                 # == max|tanh(x)|
        scalars = (n / stat).reshape(1).astype(jnp.float32)
        quant_kern = functools.partial(_quant_kbit_kernel, inv_n=1.0 / n)
        trans = total

    # Pass 2: elementwise quantization (parallel grid, scalars in SMEM).
    qf = pl.pallas_call(
        quant_kern,
        out_shape=jax.ShapeDtypeStruct((R, C), orig_dtype),
        grid=(grid_len,),
        in_specs=[smem_spec, tile_spec],
        out_specs=tile_spec,
        compiler_params=params,
        cost_estimate=pl.CostEstimate(flops=4 * total, transcendentals=trans,
                                      bytes_accessed=io_bytes + 8),
    )(scalars, slab)
    return qf.reshape(orig_shape)


# ---------------------------------------------------------------------------
# Pure-JAX reference + demo / self-check
# ---------------------------------------------------------------------------
def _ref_quant(x, w_bit):
    """Reference of the PyTorch forward for w_bit in 2..8."""
    n = float(2 ** (w_bit - 1) - 1)
    w = jnp.tanh(x)
    w = w / jnp.max(jnp.abs(w))
    return jnp.round(w * n) / n


def _check(out, ref, w_bit, name):
    # Elements landing on a round-half tie (ulp-level ambiguity between a*(1/b)
    # and a/b) may legitimately differ by one quantization step.
    step = 1.0 / float(2 ** (w_bit - 1) - 1)
    err = jnp.abs(out - ref)
    n_bad = int(jnp.sum((err > 1e-6).astype(jnp.int32)))
    max_err = float(jnp.max(err))
    assert n_bad <= max(1, out.size // 1000) and max_err <= step + 1e-6, (
        f"{name}: {n_bad} mismatches, max_err={max_err}")


if __name__ == "__main__":
    key = jax.random.PRNGKey(0)
    # OIHW-like conv weight: (out_ch=2, in_ch=4, kh=16, kw=16)
    x = jax.random.normal(key, (2, 4, 16, 16), dtype=jnp.float32)

    # --- w_bit = 4: fused single-pass path (the common case) ---
    out = jax.block_until_ready(weight_quantize(x, 4))
    assert out.shape == x.shape and out.dtype == x.dtype
    _check(out, _ref_quant(x, 4), 4, "w_bit=4 fused")

    # --- w_bit = 2: force the tiled two-pass (tanh-free reduce) path ---
    x2 = jax.random.normal(jax.random.PRNGKey(1), (4, 8, 16, 16), dtype=jnp.float32)
    out2 = jax.block_until_ready(
        weight_quantize(x2, 2, fuse_limit_bytes=0, block_bytes=4096))
    _check(out2, _ref_quant(x2, 2), 2, "w_bit=2 tiled")

    # --- w_bit = 8: ragged tiled path exercises the partial-block row mask ---
    x3 = jax.random.normal(jax.random.PRNGKey(2), (5, 21, 11), dtype=jnp.float32)
    out3 = jax.block_until_ready(
        weight_quantize(x3, 8, fuse_limit_bytes=0, block_bytes=512))
    _check(out3, _ref_quant(x3, 8), 8, "w_bit=8 ragged tiled")

    # --- w_bit = 3: ragged fused path (no pad / slice round trips) ---
    x4 = jax.random.normal(jax.random.PRNGKey(3), (3, 7, 11), dtype=jnp.float32)
    out4 = jax.block_until_ready(weight_quantize(x4, 3))
    _check(out4, _ref_quant(x4, 3), 3, "w_bit=3 ragged fused")

    # --- w_bit = 1: faithful NaN-producing branch (fused and tiled) ---
    out1 = jax.block_until_ready(weight_quantize(x, 1))
    assert out1.shape == x.shape and bool(jnp.all(jnp.isnan(out1)))
    out1t = jax.block_until_ready(
        weight_quantize(x2, 1, fuse_limit_bytes=0, block_bytes=4096))
    assert bool(jnp.all(jnp.isnan(out1t)))

    # --- w_bit = 32: identity path ---
    out32 = jax.block_until_ready(weight_quantize(x, 32))
    assert jnp.allclose(out32, x)

    print("KERNEL_OK")
</pallas_src>

<mosaic_0001>
module attributes {stable_mosaic.version = 11 : i64} {
  func.func @_fused_kbit_kernel(%arg0: memref<128x16xf32, #tpu.memory_space<vmem>>, %arg1: memref<128x16xf32, #tpu.memory_space<vmem>>) attributes {dimension_semantics = [], scalar_prefetch = 0 : i64, scratch_operands = 0 : i64, tpu.core_type = #tpu.core_type<tc>} {
    %c0 = arith.constant 0 : index
    %c0_0 = arith.constant 0 : index
    %0 = vector.load %arg0[%c0, %c0_0] : memref<128x16xf32, #tpu.memory_space<vmem>>, vector<128x16xf32>
    %1 = math.tanh %0 : vector<128x16xf32>
    %2 = math.absf %1 : vector<128x16xf32>
    %3 = vector.shape_cast %2 : vector<128x16xf32> to vector<1x128x16xf32>
    %cst = arith.constant dense<0xFF800000> : vector<1xf32>
    %4 = vector.multi_reduction <maximumf>, %3, %cst [1, 2] : vector<1x128x16xf32> to vector<1xf32>
    %5 = vector.shape_cast %4 : vector<1xf32> to vector<1x1x1xf32>
    %6 = vector.extract %5[0, 0, 0] : f32 from vector<1x1x1xf32>
    %cst_1 = arith.constant 7.000000e+00 : f32
    %7 = arith.divf %cst_1, %6 : f32
    %8 = vector.broadcast %7 : f32 to vector<128x16xf32>
    %9 = arith.mulf %1, %8 : vector<128x16xf32>
    %10 = math.roundeven %9 : vector<128x16xf32>
    %cst_2 = arith.constant 0.142857149 : f32
    %11 = vector.broadcast %cst_2 : f32 to vector<128x16xf32>
    %12 = arith.mulf %10, %11 : vector<128x16xf32>
    %c0_3 = arith.constant 0 : index
    %c0_4 = arith.constant 0 : index
    %13 = vector.load %arg1[%c0_3, %c0_4] : memref<128x16xf32, #tpu.memory_space<vmem>>, vector<128x16xf32>
    tpu.vector_store %arg1[%c0_3, %c0_4], %12 {strides = array<i32>} : memref<128x16xf32, #tpu.memory_space<vmem>>, vector<128x16xf32>,
    return
  }
}

</mosaic_0001>

<llo_original>
// kernel: tpu_custom_call.1
$region0: #{tpu_custom_call.1}
  #allocation0 [shape = 'u32[]', space=smem, size = 0x4, offset = 0x4, fixed_abs, tag = 'smem constant byte address 0x4 - core index']
  #allocation1 [shape = 'u32[144,128]{1,0:T(1,128)}', space=vmem, size = 0x12000, scoped, tag = 'internal scratch']
  %s0 = inlined_call_operand.vmem [shape: f32[128,16], index: 0, kind: input, shape index: {}]
  %s1 = inlined_call_operand.vmem [shape: f32[128,16], index: 1, kind: output, shape index: {}]
  %s2 = sld [smem:[#allocation0]]
  $region14: #{tpu_custom_call.1} parent=0
    _
  %s4 = ssub.s32 1, %s2
  %s5 = scalar_select 0, %s4, %s2
  // Predicated region
  $region2: #{tpu_custom_call.1} parent=0 // pred_check
    _
  $region3: #{tpu_custom_call.1} parent=0 // pred_check_branch
    %7 = sbr.rel (0) target = $region5
  $region4: #{tpu_custom_call.1} parent=0 // pred_region
    _
  $region5: #{tpu_custom_call.1} parent=0 // pred_fallthru
    _
  %v8 = vld [vmem:[%s0] sm:$0xff]
  %v9 = vld [vmem:[%s0 + $0x8] sm:$0xff]
  %v10 = vld [vmem:[%s0 + $0x10] sm:$0xff]
  %v11 = vld [vmem:[%s0 + $0x18] sm:$0xff]
  %v12 = vld [vmem:[%s0 + $0x20] sm:$0xff]
  %v13 = vld [vmem:[%s0 + $0x28] sm:$0xff]
  %v14 = vld [vmem:[%s0 + $0x30] sm:$0xff]
  %v15 = vld [vmem:[%s0 + $0x38] sm:$0xff]
  %v16 = vld [vmem:[%s0 + $0x40] sm:$0xff]
  %v17 = vld [vmem:[%s0 + $0x48] sm:$0xff]
  %v18 = vld [vmem:[%s0 + $0x50] sm:$0xff]
  %v19 = vld [vmem:[%s0 + $0x58] sm:$0xff]
  %v20 = vld [vmem:[%s0 + $0x60] sm:$0xff]
  %v21 = vld [vmem:[%s0 + $0x68] sm:$0xff]
  %v22 = vld [vmem:[%s0 + $0x70] sm:$0xff]
  %v23 = vld [vmem:[%s0 + $0x78] sm:$0xff]
  %v24 = vtanh.pop %v8
  %v25 = vtanh.pop %v9
  %v26 = vtanh.pop %v10
  %v27 = vtanh.pop %v11
  %v28 = vtanh.pop %v12
  %v29 = vtanh.pop %v13
  %v30 = vtanh.pop %v14
  %v31 = vtanh.pop %v15
  %v32 = vtanh.pop %v16
  %v33 = vtanh.pop %v17
  %v34 = vtanh.pop %v18
  %v35 = vtanh.pop %v19
  %v36 = vtanh.pop %v20
  %v37 = vtanh.pop %v21
  %v38 = vtanh.pop %v22
  %v39 = vtanh.pop %v23
  %v40 = vand.u32 2147483647, %v24
  %v41 = vand.u32 2147483647, %v25
  %v42 = vand.u32 2147483647, %v26
  %v43 = vand.u32 2147483647, %v27
  %v44 = vand.u32 2147483647, %v28
  %v45 = vand.u32 2147483647, %v29
  %v46 = vand.u32 2147483647, %v30
  %v47 = vand.u32 2147483647, %v31
  %v48 = vand.u32 2147483647, %v32
  %v49 = vand.u32 2147483647, %v33
  %v50 = vand.u32 2147483647, %v34
  %v51 = vand.u32 2147483647, %v35
  %v52 = vand.u32 2147483647, %v36
  %v53 = vand.u32 2147483647, %v37
  %v54 = vand.u32 2147483647, %v38
  %v55 = vand.u32 2147483647, %v39
  %vm56 = vcmask 130048
  %v57 = vsel %vm56, %v40, -inf
  %v58 = vsel %vm56, %v41, -inf
  %v59 = vsel %vm56, %v42, -inf
  %v60 = vsel %vm56, %v43, -inf
  %v61 = vsel %vm56, %v44, -inf
  %v62 = vmax.f32 %v57, %v61
  %v63 = vsel %vm56, %v45, -inf
  %v64 = vmax.f32 %v58, %v63
  %v65 = vsel %vm56, %v46, -inf
  %v66 = vmax.f32 %v59, %v65
  %v67 = vsel %vm56, %v47, -inf
  %v68 = vmax.f32 %v60, %v67
  %v69 = vsel %vm56, %v48, -inf
  %v70 = vmax.f32 %v62, %v69
  %v71 = vsel %vm56, %v49, -inf
  %v72 = vmax.f32 %v64, %v71
  %v73 = vsel %vm56, %v50, -inf
  %v74 = vmax.f32 %v66, %v73
  %v75 = vsel %vm56, %v51, -inf
  %v76 = vmax.f32 %v68, %v75
  %v77 = vsel %vm56, %v52, -inf
  %v78 = vmax.f32 %v70, %v77
  %v79 = vsel %vm56, %v53, -inf
  %v80 = vmax.f32 %v72, %v79
  %v81 = vsel %vm56, %v54, -inf
  %v82 = vmax.f32 %v74, %v81
  %v83 = vsel %vm56, %v55, -inf
  %v84 = vmax.f32 %v76, %v83
  %v85 = vmax.f32 %v78, %v80
  %v86 = vmax.f32 %v82, %v84
  %v87 = vmax.f32 %v85, %v86
  %88 = vmax.xlane.f32.xlu0 %v87
  %v89 = vpop.xlane.xlu0 %88
  %v90 = vrot.slane %v89, 4
  %v91 = vmax.f32 %v89, %v90
  %v92 = vrot.slane %v91, 2
  %v93 = vmax.f32 %v91, %v92
  %v94 = vrot.slane %v93, 1
  %v95 = vmax.f32 %v93, %v94
  %s96 = vtos %v95
  %v97 = vstv %s96
  %v98 = vrcp.pop %v97
  %s99 = vtos %v98
  %s100 = smul.f32 7.0, %s99
  %v101 = vstv %s100
  %v102 = vmul.f32 %v24, %v101
  %v103 = vmul.f32 %v25, %v101
  %v104 = vmul.f32 %v26, %v101
  %v105 = vmul.f32 %v27, %v101
  %v106 = vmul.f32 %v28, %v101
  %v107 = vmul.f32 %v29, %v101
  %v108 = vmul.f32 %v30, %v101
  %v109 = vmul.f32 %v31, %v101
  %v110 = vmul.f32 %v32, %v101
  %v111 = vmul.f32 %v33, %v101
  %v112 = vmul.f32 %v34, %v101
  %v113 = vmul.f32 %v35, %v101
  %v114 = vmul.f32 %v36, %v101
  %v115 = vmul.f32 %v37, %v101
  %v116 = vmul.f32 %v38, %v101
  %v117 = vmul.f32 %v39, %v101
  %v118 = vround.ne.pseudo %v102
  %v119 = vround.ne.pseudo %v103
  %v120 = vround.ne.pseudo %v104
  %v121 = vround.ne.pseudo %v105
  %v122 = vround.ne.pseudo %v106
  %v123 = vround.ne.pseudo %v107
  %v124 = vround.ne.pseudo %v108
  %v125 = vround.ne.pseudo %v109
  %v126 = vround.ne.pseudo %v110
  %v127 = vround.ne.pseudo %v111
  %v128 = vround.ne.pseudo %v112
  %v129 = vround.ne.pseudo %v113
  %v130 = vround.ne.pseudo %v114
  %v131 = vround.ne.pseudo %v115
  %v132 = vround.ne.pseudo %v116
  %v133 = vround.ne.pseudo %v117
  %v134 = vmul.f32 %v118, 0.14285715
  %v135 = vmul.f32 %v119, 0.14285715
  %v136 = vmul.f32 %v120, 0.14285715
  %v137 = vmul.f32 %v121, 0.14285715
  %v138 = vmul.f32 %v122, 0.14285715
  %v139 = vmul.f32 %v123, 0.14285715
  %v140 = vmul.f32 %v124, 0.14285715
  %v141 = vmul.f32 %v125, 0.14285715
  %v142 = vmul.f32 %v126, 0.14285715
  %v143 = vmul.f32 %v127, 0.14285715
  %v144 = vmul.f32 %v128, 0.14285715
  %v145 = vmul.f32 %v129, 0.14285715
  %v146 = vmul.f32 %v130, 0.14285715
  %v147 = vmul.f32 %v131, 0.14285715
  %v148 = vmul.f32 %v132, 0.14285715
  %v149 = vmul.f32 %v133, 0.14285715
  %150 = vst.msk [vmem:[%s1] sm:$0xff] %vm56, %v134
  %151 = vst.msk [vmem:[%s1 + $0x8] sm:$0xff] %vm56, %v135
  %152 = vst.msk [vmem:[%s1 + $0x10] sm:$0xff] %vm56, %v136
  %153 = vst.msk [vmem:[%s1 + $0x18] sm:$0xff] %vm56, %v137
  %154 = vst.msk [vmem:[%s1 + $0x20] sm:$0xff] %vm56, %v138
  %155 = vst.msk [vmem:[%s1 + $0x28] sm:$0xff] %vm56, %v139
  %156 = vst.msk [vmem:[%s1 + $0x30] sm:$0xff] %vm56, %v140
  %157 = vst.msk [vmem:[%s1 + $0x38] sm:$0xff] %vm56, %v141
  %158 = vst.msk [vmem:[%s1 + $0x40] sm:$0xff] %vm56, %v142
  %159 = vst.msk [vmem:[%s1 + $0x48] sm:$0xff] %vm56, %v143
  %160 = vst.msk [vmem:[%s1 + $0x50] sm:$0xff] %vm56, %v144
  %161 = vst.msk [vmem:[%s1 + $0x58] sm:$0xff] %vm56, %v145
  %162 = vst.msk [vmem:[%s1 + $0x60] sm:$0xff] %vm56, %v146
  %163 = vst.msk [vmem:[%s1 + $0x68] sm:$0xff] %vm56, %v147
  %164 = vst.msk [vmem:[%s1 + $0x70] sm:$0xff] %vm56, %v148
  %165 = vst.msk [vmem:[%s1 + $0x78] sm:$0xff] %vm56, %v149
  // Predicated region
  $region6: #{tpu_custom_call.1} parent=0 // pred_check
    _
  $region7: #{tpu_custom_call.1} parent=0 // pred_check_branch
    %167 = sbr.rel (0) target = $region9
  $region8: #{tpu_custom_call.1} parent=0 // pred_region
    _
  $region9: #{tpu_custom_call.1} parent=0 // pred_fallthru
    _
  // Predicated region
  $region10: #{tpu_custom_call.1} parent=0 // pred_check
    _
  $region11: #{tpu_custom_call.1} parent=0 // pred_check_branch
    %169 = sbr.rel (0) target = $region13
  $region12: #{tpu_custom_call.1} parent=0 // pred_region
    _
  $region13: #{tpu_custom_call.1} parent=0 // pred_fallthru
    _

</llo_original>
